<compile_context>
chip_gen: v6e
topology: v6e:2x2x1
jax: 0.10.0
libtpu: 0.0.40
codegen_flags: <defaults>
</compile_context>

<pallas_src>
import math

import numpy as np
import jax
import jax.numpy as jnp
from jax import lax
from jax.experimental import pallas as pl
from jax.experimental.pallas import tpu as pltpu


def _round_up(x, m):
    return ((x + m - 1) // m) * m


def _i32(v):
    """Python int -> np.int32 with two's-complement wrap (jaxpr literal)."""
    v &= 0xFFFFFFFF
    if v >= 0x80000000:
        v -= 1 << 32
    return np.int32(v)


def make_mlp_kernel(num_fc, drop_p=0.1, training=True):
    """Kernel closure: `num_fc` fc layers + final affine, batch on lanes.

    Activations are laid out as (features, TB).  The 1/(1-p) inverted-dropout
    scale has been folded into the weights on the host, so in-kernel dropout
    is a pure mask-to-zero.
    """
    use_dropout = training and drop_p > 0.0
    # Drop an element iff (hash & 0x7FFFFFFF) < threshold  (signed compare on
    # the low 31 uniform bits -- no unsigned types anywhere in the kernel).
    drop_threshold31 = int(drop_p * (2.0 ** 31))

    def kernel(seed_ref, user_ref, item_ref, *rest):
        # rest = w0_u, w0_i, b0, w1, b1, ..., w_{num_fc-1}, b_{num_fc-1},
        #        w_out, b_out, out_ref
        out_ref = rest[-1]
        params = rest[:-1]
        tb = user_ref.shape[1]

        if use_dropout:
            # Per-call / per-grid-step stream base, plus the per-column term
            # hoisted out of the per-layer dropout calls (JAX does not CSE the
            # iota + multiply across layers).
            pid = pl.program_id(0)
            base = (seed_ref[0] * _i32(0x9E3779B9) + pid * _i32(0x85EBCA6B))
            col = lax.broadcasted_iota(jnp.int32, (1, tb), 1)
            col_term = base + col * _i32(0x27D4EB2F)          # (1, TB) int32
        else:
            col_term = None

        def dropout_relu(v, layer_idx):
            if use_dropout:
                # Counter-based integer hash (lowbias32 finalizer), int32
                # arithmetic with wraparound; keep/drop is one signed compare
                # on the sign-masked bits.  1/(1-p) already folded into the
                # next layer's weight.
                # NOTE: stream is not bit-identical to torch nn.Dropout;
                # semantics (p, inverted scaling) match.
                row = lax.broadcasted_iota(jnp.int32, v.shape, 0)
                x = (col_term
                     + _i32((layer_idx * 0x632BE59B) & 0xFFFFFFFF)
                     + row * _i32(0x165667B1))
                x = x ^ lax.shift_right_logical(x, np.int32(16))
                x = x * _i32(0x7FEB352D)
                x = x ^ lax.shift_right_logical(x, np.int32(15))
                x = x * _i32(0x846CA68B)
                x = x ^ lax.shift_right_logical(x, np.int32(16))
                keep = (x & np.int32(0x7FFFFFFF)) >= np.int32(drop_threshold31)
                v = jnp.where(keep, v, 0.0)
            return jnp.maximum(v, 0.0)

        # First fc layer.  Embeddings arrive as (latent, TB) -> plain
        # (out0, latent) @ (latent, TB) dots (no transpose / relayout); the
        # activations land as (out0, TB): batch on the 128-lane axis.
        u = user_ref[...].astype(jnp.float32)        # (L, TB)
        it = item_ref[...].astype(jnp.float32)       # (L, TB)
        w0_u, w0_i, b0 = params[0][...], params[1][...], params[2][...]
        v = (jnp.dot(w0_u, u, preferred_element_type=jnp.float32)
             + jnp.dot(w0_i, it, preferred_element_type=jnp.float32)
             + b0)                                   # (out0, TB)
        v = dropout_relu(v, 0)

        # Remaining fc layers: (out_k, in_k) @ (in_k, TB) -> (out_k, TB).
        for k in range(1, num_fc):
            w = params[3 + 2 * (k - 1)][...]
            b = params[4 + 2 * (k - 1)][...]
            v = jnp.dot(w, v, preferred_element_type=jnp.float32) + b
            v = dropout_relu(v, k)

        # Final affine_output: (1, last) @ (last, TB) -> lane-dense (1, TB).
        w_out, b_out = params[-2][...], params[-1][...]
        out_ref[...] = (jnp.dot(w_out, v, preferred_element_type=jnp.float32)
                        + b_out)
        # NOTE: forward() does NOT apply the sigmoid (matches the torch module).

    return kernel


def mlp_forward(user_emb, item_emb, params, seed, num_fc, *,
                drop_p=0.1, training=True, tb_max=16384):
    """NCF MLP forward.

    params[k] = (W, b) in torch layout W:(out, in), b:(out, 1).
    user_emb / item_emb: (batch, latent), any float dtype (bf16 halves the
    per-step DMA; both are cast to f32 in-kernel, matching torch .float()).
    Returns (batch, 1) float32 ratings (pre-sigmoid).
    """
    batch, latent = user_emb.shape

    # Batch tile: as big as useful (amortizes ~0.35 us/grid-step overhead and
    # keeps the (1, tb) output slab lane-dense), multiple of 128.  If a single
    # step would cover everything and the batch allows, split into >= 2 steps
    # so the "parallel" axis shards across both TensorCores on v7x.
    rounded = _round_up(batch, 128)
    tb = min(_round_up(tb_max, 128), rounded)
    if rounded // tb < 2 and rounded >= 256:
        tb = _round_up((rounded + 1) // 2, 128)
    padded = _round_up(batch, tb)
    grid = (padded // tb,)

    # Embeddings go in as (latent, batch): the block is (latent, tb) with the
    # batch on the 128-lane axis (no lane-padding waste, no A@B^T relayout).
    user_t = user_emb.T
    item_t = item_emb.T
    if padded != batch:
        user_t = jnp.pad(user_t, ((0, 0), (0, padded - batch)))
        item_t = jnp.pad(item_t, ((0, 0), (0, padded - batch)))

    # No (batch, 2L) concat in HBM: split the first-layer weight instead.
    # Fold each dropout's 1/(1-p) inverted scale into the *next* layer's
    # weight (zero runtime cost; biases are unaffected; math is identical).
    inv_keep = float(1.0 / (1.0 - drop_p)) if (training and drop_p > 0.0) else 1.0
    w0, b0 = params[0]
    flat = [w0[:, :latent], w0[:, latent:], b0]
    for w, b in params[1:]:
        flat.extend([w * inv_keep, b])

    kernel = make_mlp_kernel(num_fc, drop_p=drop_p, training=training)

    in_specs = (
        [pl.BlockSpec(memory_space=pltpu.MemorySpace.SMEM)]            # seed
        + [pl.BlockSpec((latent, tb), lambda i: (0, i))] * 2           # u, i
        + [pl.BlockSpec(p.shape, lambda i: (0, 0)) for p in flat]      # resident
    )
    out_specs = pl.BlockSpec((1, tb), lambda i: (0, i))

    flops = 2 * batch * sum(w.shape[0] * w.shape[1] for w, _ in params)
    bytes_accessed = int(
        user_t.size * user_t.dtype.itemsize
        + item_t.size * item_t.dtype.itemsize
        + padded * 4
        + sum(p.size * p.dtype.itemsize for p in flat))

    out = pl.pallas_call(
        kernel,
        out_shape=jax.ShapeDtypeStruct((1, padded), jnp.float32),
        grid=grid,
        in_specs=in_specs,
        out_specs=out_specs,
        compiler_params=pltpu.CompilerParams(
            dimension_semantics=("parallel",),
            # Explicit budget: under v7x's 64 MiB physical VMEM, above the
            # 16/32 MiB default scoped limits so the big batch tile compiles.
            vmem_limit_bytes=48 * 1024 * 1024,
        ),
        cost_estimate=pl.CostEstimate(
            flops=flops, transcendentals=0, bytes_accessed=bytes_accessed),
    )(jnp.asarray([seed], dtype=jnp.int32), user_t, item_t, *flat)

    return out[:, :batch].T   # (batch, 1)


def init_linear(key, in_size, out_size):
    """Deterministic init mimicking torch.nn.Linear (uniform +/- 1/sqrt(in)),
    stored in torch layout: W (out, in), b (out, 1)."""
    kw, kb = jax.random.split(key)
    bound = 1.0 / math.sqrt(in_size)
    w = jax.random.uniform(kw, (out_size, in_size), jnp.float32, -bound, bound)
    b = jax.random.uniform(kb, (out_size, 1), jnp.float32, -bound, bound)
    return w, b


if __name__ == "__main__":
    config = {
        "latent_dim": 8,
        "nlayers": 3,
        "layers": [16, 32, 16, 8],   # layers[0] == 2 * latent_dim
    }

    key = jax.random.PRNGKey(0)
    k_user, k_item, *k_params = jax.random.split(key, 2 + len(config["layers"]))

    batch = 2
    user_emb = jax.random.normal(k_user, (batch, config["latent_dim"]), jnp.float32)
    item_emb = jax.random.normal(k_item, (batch, config["latent_dim"]), jnp.float32)

    # fc layers + final affine_output (out_features=1)
    layer_sizes = list(zip(config["layers"][:-1], config["layers"][1:]))
    params = [init_linear(k_params[i], in_sz, out_sz)
              for i, (in_sz, out_sz) in enumerate(layer_sizes)]
    params.append(init_linear(k_params[len(layer_sizes)], config["layers"][-1], 1))

    rating = mlp_forward(user_emb, item_emb, params, seed=1234,
                         num_fc=len(layer_sizes))
    rating = jax.block_until_ready(rating)
    assert rating.shape == (batch, 1) and rating.dtype == jnp.float32
    assert bool(jnp.all(jnp.isfinite(rating)))
    print("KERNEL_OK")
</pallas_src>

<mosaic_0001>
module attributes {stable_mosaic.version = 11 : i64} {
  func.func @kernel(%arg0: i32, %arg1: memref<1xi32, #tpu.memory_space<smem>>, %arg2: memref<8x128xf32, #tpu.memory_space<vmem>>, %arg3: memref<8x128xf32, #tpu.memory_space<vmem>>, %arg4: memref<32x8xf32, #tpu.memory_space<vmem>>, %arg5: memref<32x8xf32, #tpu.memory_space<vmem>>, %arg6: memref<32x1xf32, #tpu.memory_space<vmem>>, %arg7: memref<16x32xf32, #tpu.memory_space<vmem>>, %arg8: memref<16x1xf32, #tpu.memory_space<vmem>>, %arg9: memref<8x16xf32, #tpu.memory_space<vmem>>, %arg10: memref<8x1xf32, #tpu.memory_space<vmem>>, %arg11: memref<1x8xf32, #tpu.memory_space<vmem>>, %arg12: memref<1x1xf32, #tpu.memory_space<vmem>>, %arg13: memref<1x128xf32, #tpu.memory_space<vmem>>) attributes {dimension_semantics = [#tpu.dimension_semantics<parallel>], iteration_bounds = array<i64: 1>, scalar_prefetch = 0 : i64, scratch_operands = 0 : i64, tpu.core_type = #tpu.core_type<tc>, window_params = [{transform_indices = @transform_0, window_bounds = array<i64: 1>}, {transform_indices = @transform_1, window_bounds = array<i64: 8, 128>}, {transform_indices = @transform_2, window_bounds = array<i64: 8, 128>}, {pipeline_mode = #tpu.pipeline_mode<synchronous>, transform_indices = @transform_3, window_bounds = array<i64: 32, 8>}, {pipeline_mode = #tpu.pipeline_mode<synchronous>, transform_indices = @transform_4, window_bounds = array<i64: 32, 8>}, {pipeline_mode = #tpu.pipeline_mode<synchronous>, transform_indices = @transform_5, window_bounds = array<i64: 32, 1>}, {pipeline_mode = #tpu.pipeline_mode<synchronous>, transform_indices = @transform_6, window_bounds = array<i64: 16, 32>}, {pipeline_mode = #tpu.pipeline_mode<synchronous>, transform_indices = @transform_7, window_bounds = array<i64: 16, 1>}, {pipeline_mode = #tpu.pipeline_mode<synchronous>, transform_indices = @transform_8, window_bounds = array<i64: 8, 16>}, {pipeline_mode = #tpu.pipeline_mode<synchronous>, transform_indices = @transform_9, window_bounds = array<i64: 8, 1>}, {pipeline_mode = #tpu.pipeline_mode<synchronous>, transform_indices = @transform_10, window_bounds = array<i64: 1, 8>}, {pipeline_mode = #tpu.pipeline_mode<synchronous>, transform_indices = @transform_11, window_bounds = array<i64: 1, 1>}, {transform_indices = @transform_12, window_bounds = array<i64: 1, 128>}]} {
    %c0 = arith.constant 0 : index
    %0 = memref.load %arg1[%c0] : memref<1xi32, #tpu.memory_space<smem>>
    %c-1640531527_i32 = arith.constant -1640531527 : i32
    %1 = arith.muli %0, %c-1640531527_i32 : i32
    %c-2048144789_i32 = arith.constant -2048144789 : i32
    %2 = arith.muli %arg0, %c-2048144789_i32 : i32
    %3 = arith.addi %1, %2 : i32
    %4 = tpu.iota {dimensions = array<i32: 1>} : vector<1x128xi32>
    %c668265263_i32 = arith.constant 668265263 : i32
    %5 = vector.broadcast %c668265263_i32 : i32 to vector<1x128xi32>
    %6 = arith.muli %4, %5 : vector<1x128xi32>
    %7 = vector.broadcast %3 : i32 to vector<1x128xi32>
    %8 = arith.addi %7, %6 : vector<1x128xi32>
    %c0_0 = arith.constant 0 : index
    %c0_1 = arith.constant 0 : index
    %9 = vector.load %arg2[%c0_0, %c0_1] : memref<8x128xf32, #tpu.memory_space<vmem>>, vector<8x128xf32>
    %c0_2 = arith.constant 0 : index
    %c0_3 = arith.constant 0 : index
    %10 = vector.load %arg3[%c0_2, %c0_3] : memref<8x128xf32, #tpu.memory_space<vmem>>, vector<8x128xf32>
    %c0_4 = arith.constant 0 : index
    %c0_5 = arith.constant 0 : index
    %11 = vector.load %arg4[%c0_4, %c0_5] : memref<32x8xf32, #tpu.memory_space<vmem>>, vector<32x8xf32>
    %c0_6 = arith.constant 0 : index
    %c0_7 = arith.constant 0 : index
    %12 = vector.load %arg5[%c0_6, %c0_7] : memref<32x8xf32, #tpu.memory_space<vmem>>, vector<32x8xf32>
    %c0_8 = arith.constant 0 : index
    %c0_9 = arith.constant 0 : index
    %13 = vector.load %arg6[%c0_8, %c0_9] : memref<32x1xf32, #tpu.memory_space<vmem>>, vector<32x1xf32>
    %cst = arith.constant dense<0.000000e+00> : vector<32x128xf32>
    %14 = tpu.matmul %11, %9, %cst {dimension_numbers = #tpu.dot_dimension_numbers<[1], [0], [0], [1], [0, 0, 1, 1], [], []>} : vector<32x8xf32>, vector<8x128xf32>, vector<32x128xf32> -> vector<32x128xf32>
    %cst_10 = arith.constant dense<0.000000e+00> : vector<32x128xf32>
    %15 = tpu.matmul %12, %10, %cst_10 {dimension_numbers = #tpu.dot_dimension_numbers<[1], [0], [0], [1], [0, 0, 1, 1], [], []>} : vector<32x8xf32>, vector<8x128xf32>, vector<32x128xf32> -> vector<32x128xf32>
    %16 = arith.addf %14, %15 : vector<32x128xf32>
    %17 = vector.broadcast %13 : vector<32x1xf32> to vector<32x128xf32>
    %18 = arith.addf %16, %17 : vector<32x128xf32>
    %19 = tpu.iota {dimensions = array<i32: 0>} : vector<32x128xi32>
    %c0_i32 = arith.constant 0 : i32
    %20 = vector.broadcast %c0_i32 : i32 to vector<1x128xi32>
    %21 = arith.addi %8, %20 : vector<1x128xi32>
    %c374761393_i32 = arith.constant 374761393 : i32
    %22 = vector.broadcast %c374761393_i32 : i32 to vector<32x128xi32>
    %23 = arith.muli %19, %22 : vector<32x128xi32>
    %24 = vector.broadcast %21 : vector<1x128xi32> to vector<32x128xi32>
    %25 = arith.addi %24, %23 : vector<32x128xi32>
    %c16_i32 = arith.constant 16 : i32
    %26 = vector.broadcast %c16_i32 : i32 to vector<32x128xi32>
    %27 = arith.shrui %25, %26 : vector<32x128xi32>
    %28 = arith.xori %25, %27 : vector<32x128xi32>
    %c2146121005_i32 = arith.constant 2146121005 : i32
    %29 = vector.broadcast %c2146121005_i32 : i32 to vector<32x128xi32>
    %30 = arith.muli %28, %29 : vector<32x128xi32>
    %c15_i32 = arith.constant 15 : i32
    %31 = vector.broadcast %c15_i32 : i32 to vector<32x128xi32>
    %32 = arith.shrui %30, %31 : vector<32x128xi32>
    %33 = arith.xori %30, %32 : vector<32x128xi32>
    %c-2073254261_i32 = arith.constant -2073254261 : i32
    %34 = vector.broadcast %c-2073254261_i32 : i32 to vector<32x128xi32>
    %35 = arith.muli %33, %34 : vector<32x128xi32>
    %c16_i32_11 = arith.constant 16 : i32
    %36 = vector.broadcast %c16_i32_11 : i32 to vector<32x128xi32>
    %37 = arith.shrui %35, %36 : vector<32x128xi32>
    %38 = arith.xori %35, %37 : vector<32x128xi32>
    %c2147483647_i32 = arith.constant 2147483647 : i32
    %39 = vector.broadcast %c2147483647_i32 : i32 to vector<32x128xi32>
    %40 = arith.andi %38, %39 : vector<32x128xi32>
    %c214748364_i32 = arith.constant 214748364 : i32
    %41 = vector.broadcast %c214748364_i32 : i32 to vector<32x128xi32>
    %42 = arith.cmpi sge, %40, %41 : vector<32x128xi32>
    %cst_12 = arith.constant 0.000000e+00 : f32
    %43 = vector.broadcast %cst_12 : f32 to vector<32x128xf32>
    %44 = arith.select %42, %18, %43 : vector<32x128xi1>, vector<32x128xf32>
    %cst_13 = arith.constant 0.000000e+00 : f32
    %45 = vector.broadcast %cst_13 : f32 to vector<32x128xf32>
    %46 = arith.maximumf %44, %45 : vector<32x128xf32>
    %c0_14 = arith.constant 0 : index
    %c0_15 = arith.constant 0 : index
    %47 = vector.load %arg7[%c0_14, %c0_15] : memref<16x32xf32, #tpu.memory_space<vmem>>, vector<16x32xf32>
    %c0_16 = arith.constant 0 : index
    %c0_17 = arith.constant 0 : index
    %48 = vector.load %arg8[%c0_16, %c0_17] : memref<16x1xf32, #tpu.memory_space<vmem>>, vector<16x1xf32>
    %cst_18 = arith.constant dense<0.000000e+00> : vector<16x128xf32>
    %49 = tpu.matmul %47, %46, %cst_18 {dimension_numbers = #tpu.dot_dimension_numbers<[1], [0], [0], [1], [0, 0, 1, 1], [], []>} : vector<16x32xf32>, vector<32x128xf32>, vector<16x128xf32> -> vector<16x128xf32>
    %50 = vector.broadcast %48 : vector<16x1xf32> to vector<16x128xf32>
    %51 = arith.addf %49, %50 : vector<16x128xf32>
    %52 = tpu.iota {dimensions = array<i32: 0>} : vector<16x128xi32>
    %c1663821211_i32 = arith.constant 1663821211 : i32
    %53 = vector.broadcast %c1663821211_i32 : i32 to vector<1x128xi32>
    %54 = arith.addi %8, %53 : vector<1x128xi32>
    %c374761393_i32_19 = arith.constant 374761393 : i32
    %55 = vector.broadcast %c374761393_i32_19 : i32 to vector<16x128xi32>
    %56 = arith.muli %52, %55 : vector<16x128xi32>
    %57 = vector.broadcast %54 : vector<1x128xi32> to vector<16x128xi32>
    %58 = arith.addi %57, %56 : vector<16x128xi32>
    %c16_i32_20 = arith.constant 16 : i32
    %59 = vector.broadcast %c16_i32_20 : i32 to vector<16x128xi32>
    %60 = arith.shrui %58, %59 : vector<16x128xi32>
    %61 = arith.xori %58, %60 : vector<16x128xi32>
    %c2146121005_i32_21 = arith.constant 2146121005 : i32
    %62 = vector.broadcast %c2146121005_i32_21 : i32 to vector<16x128xi32>
    %63 = arith.muli %61, %62 : vector<16x128xi32>
    %c15_i32_22 = arith.constant 15 : i32
    %64 = vector.broadcast %c15_i32_22 : i32 to vector<16x128xi32>
    %65 = arith.shrui %63, %64 : vector<16x128xi32>
    %66 = arith.xori %63, %65 : vector<16x128xi32>
    %c-2073254261_i32_23 = arith.constant -2073254261 : i32
    %67 = vector.broadcast %c-2073254261_i32_23 : i32 to vector<16x128xi32>
    %68 = arith.muli %66, %67 : vector<16x128xi32>
    %c16_i32_24 = arith.constant 16 : i32
    %69 = vector.broadcast %c16_i32_24 : i32 to vector<16x128xi32>
    %70 = arith.shrui %68, %69 : vector<16x128xi32>
    %71 = arith.xori %68, %70 : vector<16x128xi32>
    %c2147483647_i32_25 = arith.constant 2147483647 : i32
    %72 = vector.broadcast %c2147483647_i32_25 : i32 to vector<16x128xi32>
    %73 = arith.andi %71, %72 : vector<16x128xi32>
    %c214748364_i32_26 = arith.constant 214748364 : i32
    %74 = vector.broadcast %c214748364_i32_26 : i32 to vector<16x128xi32>
    %75 = arith.cmpi sge, %73, %74 : vector<16x128xi32>
    %cst_27 = arith.constant 0.000000e+00 : f32
    %76 = vector.broadcast %cst_27 : f32 to vector<16x128xf32>
    %77 = arith.select %75, %51, %76 : vector<16x128xi1>, vector<16x128xf32>
    %cst_28 = arith.constant 0.000000e+00 : f32
    %78 = vector.broadcast %cst_28 : f32 to vector<16x128xf32>
    %79 = arith.maximumf %77, %78 : vector<16x128xf32>
    %c0_29 = arith.constant 0 : index
    %c0_30 = arith.constant 0 : index
    %80 = vector.load %arg9[%c0_29, %c0_30] : memref<8x16xf32, #tpu.memory_space<vmem>>, vector<8x16xf32>
    %c0_31 = arith.constant 0 : index
    %c0_32 = arith.constant 0 : index
    %81 = vector.load %arg10[%c0_31, %c0_32] : memref<8x1xf32, #tpu.memory_space<vmem>>, vector<8x1xf32>
    %cst_33 = arith.constant dense<0.000000e+00> : vector<8x128xf32>
    %82 = tpu.matmul %80, %79, %cst_33 {dimension_numbers = #tpu.dot_dimension_numbers<[1], [0], [0], [1], [0, 0, 1, 1], [], []>} : vector<8x16xf32>, vector<16x128xf32>, vector<8x128xf32> -> vector<8x128xf32>
    %83 = vector.broadcast %81 : vector<8x1xf32> to vector<8x128xf32>
    %84 = arith.addf %82, %83 : vector<8x128xf32>
    %85 = tpu.iota {dimensions = array<i32: 0>} : vector<8x128xi32>
    %c-967324874_i32 = arith.constant -967324874 : i32
    %86 = vector.broadcast %c-967324874_i32 : i32 to vector<1x128xi32>
    %87 = arith.addi %8, %86 : vector<1x128xi32>
    %c374761393_i32_34 = arith.constant 374761393 : i32
    %88 = vector.broadcast %c374761393_i32_34 : i32 to vector<8x128xi32>
    %89 = arith.muli %85, %88 : vector<8x128xi32>
    %90 = vector.broadcast %87 : vector<1x128xi32> to vector<8x128xi32>
    %91 = arith.addi %90, %89 : vector<8x128xi32>
    %c16_i32_35 = arith.constant 16 : i32
    %92 = vector.broadcast %c16_i32_35 : i32 to vector<8x128xi32>
    %93 = arith.shrui %91, %92 : vector<8x128xi32>
    %94 = arith.xori %91, %93 : vector<8x128xi32>
    %c2146121005_i32_36 = arith.constant 2146121005 : i32
    %95 = vector.broadcast %c2146121005_i32_36 : i32 to vector<8x128xi32>
    %96 = arith.muli %94, %95 : vector<8x128xi32>
    %c15_i32_37 = arith.constant 15 : i32
    %97 = vector.broadcast %c15_i32_37 : i32 to vector<8x128xi32>
    %98 = arith.shrui %96, %97 : vector<8x128xi32>
    %99 = arith.xori %96, %98 : vector<8x128xi32>
    %c-2073254261_i32_38 = arith.constant -2073254261 : i32
    %100 = vector.broadcast %c-2073254261_i32_38 : i32 to vector<8x128xi32>
    %101 = arith.muli %99, %100 : vector<8x128xi32>
    %c16_i32_39 = arith.constant 16 : i32
    %102 = vector.broadcast %c16_i32_39 : i32 to vector<8x128xi32>
    %103 = arith.shrui %101, %102 : vector<8x128xi32>
    %104 = arith.xori %101, %103 : vector<8x128xi32>
    %c2147483647_i32_40 = arith.constant 2147483647 : i32
    %105 = vector.broadcast %c2147483647_i32_40 : i32 to vector<8x128xi32>
    %106 = arith.andi %104, %105 : vector<8x128xi32>
    %c214748364_i32_41 = arith.constant 214748364 : i32
    %107 = vector.broadcast %c214748364_i32_41 : i32 to vector<8x128xi32>
    %108 = arith.cmpi sge, %106, %107 : vector<8x128xi32>
    %cst_42 = arith.constant 0.000000e+00 : f32
    %109 = vector.broadcast %cst_42 : f32 to vector<8x128xf32>
    %110 = arith.select %108, %84, %109 : vector<8x128xi1>, vector<8x128xf32>
    %cst_43 = arith.constant 0.000000e+00 : f32
    %111 = vector.broadcast %cst_43 : f32 to vector<8x128xf32>
    %112 = arith.maximumf %110, %111 : vector<8x128xf32>
    %c0_44 = arith.constant 0 : index
    %c0_45 = arith.constant 0 : index
    %113 = vector.load %arg11[%c0_44, %c0_45] : memref<1x8xf32, #tpu.memory_space<vmem>>, vector<1x8xf32>
    %c0_46 = arith.constant 0 : index
    %c0_47 = arith.constant 0 : index
    %114 = vector.load %arg12[%c0_46, %c0_47] : memref<1x1xf32, #tpu.memory_space<vmem>>, vector<1x1xf32>
    %cst_48 = arith.constant dense<0.000000e+00> : vector<1x128xf32>
    %115 = tpu.matmul %113, %112, %cst_48 {dimension_numbers = #tpu.dot_dimension_numbers<[1], [0], [0], [1], [0, 0, 1, 1], [], []>} : vector<1x8xf32>, vector<8x128xf32>, vector<1x128xf32> -> vector<1x128xf32>
    %116 = vector.broadcast %114 : vector<1x1xf32> to vector<1x128xf32>
    %117 = arith.addf %115, %116 : vector<1x128xf32>
    %c0_49 = arith.constant 0 : index
    %c0_50 = arith.constant 0 : index
    %118 = vector.load %arg13[%c0_49, %c0_50] : memref<1x128xf32, #tpu.memory_space<vmem>>, vector<1x128xf32>
    tpu.vector_store %arg13[%c0_49, %c0_50], %117 {strides = array<i32>} : memref<1x128xf32, #tpu.memory_space<vmem>>, vector<1x128xf32>,
    return
  }
  func.func @transform_0(%arg0: i32) -> i32 {
    %c0_i32 = arith.constant 0 : i32
    %c0_i32_0 = arith.constant 0 : i32
    return %c0_i32 : i32
  }
  func.func @transform_1(%arg0: i32) -> (i32, i32) {
    %c0_i32 = arith.constant 0 : i32
    %c0_i32_0 = arith.constant 0 : i32
    return %c0_i32, %arg0 : i32, i32
  }
  func.func @transform_2(%arg0: i32) -> (i32, i32) {
    %c0_i32 = arith.constant 0 : i32
    %c0_i32_0 = arith.constant 0 : i32
    return %c0_i32, %arg0 : i32, i32
  }
  func.func @transform_3(%arg0: i32) -> (i32, i32) {
    %c0_i32 = arith.constant 0 : i32
    %c0_i32_0 = arith.constant 0 : i32
    %c0_i32_1 = arith.constant 0 : i32
    return %c0_i32, %c0_i32_0 : i32, i32
  }
  func.func @transform_4(%arg0: i32) -> (i32, i32) {
    %c0_i32 = arith.constant 0 : i32
    %c0_i32_0 = arith.constant 0 : i32
    %c0_i32_1 = arith.constant 0 : i32
    return %c0_i32, %c0_i32_0 : i32, i32
  }
  func.func @transform_5(%arg0: i32) -> (i32, i32) {
    %c0_i32 = arith.constant 0 : i32
    %c0_i32_0 = arith.constant 0 : i32
    %c0_i32_1 = arith.constant 0 : i32
    return %c0_i32, %c0_i32_0 : i32, i32
  }
  func.func @transform_6(%arg0: i32) -> (i32, i32) {
    %c0_i32 = arith.constant 0 : i32
    %c0_i32_0 = arith.constant 0 : i32
    %c0_i32_1 = arith.constant 0 : i32
    return %c0_i32, %c0_i32_0 : i32, i32
  }
  func.func @transform_7(%arg0: i32) -> (i32, i32) {
    %c0_i32 = arith.constant 0 : i32
    %c0_i32_0 = arith.constant 0 : i32
    %c0_i32_1 = arith.constant 0 : i32
    return %c0_i32, %c0_i32_0 : i32, i32
  }
  func.func @transform_8(%arg0: i32) -> (i32, i32) {
    %c0_i32 = arith.constant 0 : i32
    %c0_i32_0 = arith.constant 0 : i32
    %c0_i32_1 = arith.constant 0 : i32
    return %c0_i32, %c0_i32_0 : i32, i32
  }
  func.func @transform_9(%arg0: i32) -> (i32, i32) {
    %c0_i32 = arith.constant 0 : i32
    %c0_i32_0 = arith.constant 0 : i32
    %c0_i32_1 = arith.constant 0 : i32
    return %c0_i32, %c0_i32_0 : i32, i32
  }
  func.func @transform_10(%arg0: i32) -> (i32, i32) {
    %c0_i32 = arith.constant 0 : i32
    %c0_i32_0 = arith.constant 0 : i32
    %c0_i32_1 = arith.constant 0 : i32
    return %c0_i32, %c0_i32_0 : i32, i32
  }
  func.func @transform_11(%arg0: i32) -> (i32, i32) {
    %c0_i32 = arith.constant 0 : i32
    %c0_i32_0 = arith.constant 0 : i32
    %c0_i32_1 = arith.constant 0 : i32
    return %c0_i32, %c0_i32_0 : i32, i32
  }
  func.func @transform_12(%arg0: i32) -> (i32, i32) {
    %c0_i32 = arith.constant 0 : i32
    %c0_i32_0 = arith.constant 0 : i32
    return %c0_i32, %arg0 : i32, i32
  }
}

</mosaic_0001>

<llo_original>
// kernel: tpu_custom_call.1
$region0: #{tpu_custom_call.1}
  #allocation0 [shape = 'u32[]', space=smem, size = 0x4, offset = 0x4, fixed_abs, tag = 'smem constant byte address 0x4 - core index']
  #allocation1 [shape = 'u32[144,128]{1,0:T(1,128)}', space=vmem, size = 0x12000, scoped, tag = 'internal scratch']
  #allocation2 [shape = 's32[1]{0:T(128)S(6)}', space=smem, size = 0x200, scoped, tag = 'scoped memory for tpu_custom_call.1']
  #allocation3 [shape = 'f32[1,1]{1,0:T(1,128)S(1)}', space=vmem, size = 0x200, scoped, tag = 'scoped memory for tpu_custom_call.1']
  %s0 = inlined_call_operand.<no memory space> [shape: s32[1], index: 0, kind: input, shape index: {}]
  %s1 = inlined_call_operand.vmem [shape: f32[8,128], index: 1, kind: input, shape index: {}]
  %s2 = inlined_call_operand.vmem [shape: f32[8,128], index: 2, kind: input, shape index: {}]
  %s3 = inlined_call_operand.vmem [shape: f32[32,8], index: 3, kind: input, shape index: {}]
  %s4 = inlined_call_operand.vmem [shape: f32[32,8], index: 4, kind: input, shape index: {}]
  %s5 = inlined_call_operand.vmem [shape: f32[32,1], index: 5, kind: input, shape index: {}]
  %s6 = inlined_call_operand.vmem [shape: f32[16,32], index: 6, kind: input, shape index: {}]
  %s7 = inlined_call_operand.vmem [shape: f32[16,1], index: 7, kind: input, shape index: {}]
  %s8 = inlined_call_operand.vmem [shape: f32[8,16], index: 8, kind: input, shape index: {}]
  %s9 = inlined_call_operand.vmem [shape: f32[8,1], index: 9, kind: input, shape index: {}]
  %s10 = inlined_call_operand.vmem [shape: f32[1,8], index: 10, kind: input, shape index: {}]
  %s11 = inlined_call_operand.<no memory space> [shape: f32[1,1], index: 11, kind: input, shape index: {}]
  %s12 = inlined_call_operand.hbm [shape: f32[1,128], index: 12, kind: output, shape index: {}]
  %s13 = sld [smem:[#allocation0]]
  $region58: #{tpu_custom_call.1} parent=0
    _
  %s15 = ssub.s32 1, %s13
  %s16 = scalar_select 0, %s15, %s13
  %17 = sst [smem:[#allocation2]] %s0
  %v18 = vstv %s11
  %19 = vst [vmem:[#allocation3] sm:$0x1] %v18
  $region1: #{tpu_custom_call.1} parent=0
    #allocation4 [shape = 'u8[512]{0}', space=vmem, size = 0x400, scoped, tag = 'output window, operand 0, single buffered']
    #allocation5 [shape = 's32[1]{0}', space=sflag, size = 0x4, scoped, tag = 'scoped memory for tpu_custom_call.1']
    %20 = vsyncpa [#allocation5], 0
    // Predicated region
    $region2: #{tpu_custom_call.1} parent=1 // pred_check
      _
    $region3: #{tpu_custom_call.1} parent=1 // pred_check_branch
      %22 = sbr.rel (0) target = $region5
    $region4: #{tpu_custom_call.1} parent=1 // pred_region
      _
    $region5: #{tpu_custom_call.1} parent=1 // pred_fallthru
      _
    // Predicated region
    $region6: #{tpu_custom_call.1} parent=1 // pred_check
      _
    $region7: #{tpu_custom_call.1} parent=1 // pred_check_branch
      %24 = sbr.rel (0) target = $region9
    $region8: #{tpu_custom_call.1} parent=1 // pred_region
      _
    $region9: #{tpu_custom_call.1} parent=1 // pred_fallthru
      _
    // Predicated region
    $region10: #{tpu_custom_call.1} parent=1 // pred_check
      _
    $region11: #{tpu_custom_call.1} parent=1 // pred_check_branch
      %26 = sbr.rel (0) target = $region13
    $region12: #{tpu_custom_call.1} parent=1 // pred_region
      _
    $region13: #{tpu_custom_call.1} parent=1 // pred_fallthru
      _
    // Predicated region
    $region14: #{tpu_custom_call.1} parent=1 // pred_check
      _
    $region15: #{tpu_custom_call.1} parent=1 // pred_check_branch
      %28 = sbr.rel (0) target = $region17
    $region16: #{tpu_custom_call.1} parent=1 // pred_region
      _
    $region17: #{tpu_custom_call.1} parent=1 // pred_fallthru
      _
    // Predicated region
    $region18: #{tpu_custom_call.1} parent=1 // pred_check
      _
    $region19: #{tpu_custom_call.1} parent=1 // pred_check_branch
      %30 = sbr.rel (0) target = $region21
    $region20: #{tpu_custom_call.1} parent=1 // pred_region
      _
    $region21: #{tpu_custom_call.1} parent=1 // pred_fallthru
      _
    // Predicated region
    $region22: #{tpu_custom_call.1} parent=1 // pred_check
      _
    $region23: #{tpu_custom_call.1} parent=1 // pred_check_branch
      %32 = sbr.rel (0) target = $region25
    $region24: #{tpu_custom_call.1} parent=1 // pred_region
      _
    $region25: #{tpu_custom_call.1} parent=1 // pred_fallthru
      _
    // Predicated region
    $region26: #{tpu_custom_call.1} parent=1 // pred_check
      _
    $region27: #{tpu_custom_call.1} parent=1 // pred_check_branch
      %34 = sbr.rel (0) target = $region29
    $region28: #{tpu_custom_call.1} parent=1 // pred_region
      _
    $region29: #{tpu_custom_call.1} parent=1 // pred_fallthru
      _
    // Predicated region
    $region30: #{tpu_custom_call.1} parent=1 // pred_check
      _
    $region31: #{tpu_custom_call.1} parent=1 // pred_check_branch
      %36 = sbr.rel (0) target = $region33
    $region32: #{tpu_custom_call.1} parent=1 // pred_region
      _
    $region33: #{tpu_custom_call.1} parent=1 // pred_fallthru
      _
    // Predicated region
    $region34: #{tpu_custom_call.1} parent=1 // pred_check
      _
    $region35: #{tpu_custom_call.1} parent=1 // pred_check_branch
      %38 = sbr.rel (0) target = $region37
    $region36: #{tpu_custom_call.1} parent=1 // pred_region
      _
    $region37: #{tpu_custom_call.1} parent=1 // pred_fallthru
      _
    // Predicated region
    $region38: #{tpu_custom_call.1} parent=1 // pred_check
      _
    $region39: #{tpu_custom_call.1} parent=1 // pred_check_branch
      %40 = sbr.rel (0) target = $region41
    $region40: #{tpu_custom_call.1} parent=1 // pred_region
      _
    $region41: #{tpu_custom_call.1} parent=1 // pred_fallthru
      _
    // Predicated region
    $region42: #{tpu_custom_call.1} parent=1 // pred_check
      _
    $region43: #{tpu_custom_call.1} parent=1 // pred_check_branch
      %42 = sbr.rel (0) target = $region45
    $region44: #{tpu_custom_call.1} parent=1 // pred_region
      _
    $region45: #{tpu_custom_call.1} parent=1 // pred_fallthru
      _
    // Predicated region
    $region46: #{tpu_custom_call.1} parent=1 // pred_check
      _
    $region47: #{tpu_custom_call.1} parent=1 // pred_check_branch
      %44 = sbr.rel (0) target = $region49
    $region48: #{tpu_custom_call.1} parent=1 // pred_region
      _
    $region49: #{tpu_custom_call.1} parent=1 // pred_fallthru
      _
    %s45 = sld [smem:[#allocation2]]
    %s46 = smul.u32 %s45, 2654435769
    %s47 = smul.u32 0, 2246822507
    %s48 = sadd.s32 %s46, %s47
    %v49 = vlaneseq
    %v50 = vand.u32 %v49, 127
    %v51 = vmul.u32 %v50, 668265263
    %v52 = vstv %s48
    %v53 = vadd.s32 %v52, %v51
    %v54 = vld [vmem:[%s1] sm:$0xff]
    %v55 = vld [vmem:[%s2] sm:$0xff]
    %v56 = vld [vmem:[%s3] sm:$0xff]
    %v57 = vld [vmem:[%s3 + $0x8] sm:$0xff]
    %v58 = vld [vmem:[%s3 + $0x10] sm:$0xff]
    %v59 = vld [vmem:[%s3 + $0x18] sm:$0xff]
    %v60 = vld [vmem:[%s4] sm:$0xff]
    %v61 = vld [vmem:[%s4 + $0x8] sm:$0xff]
    %v62 = vld [vmem:[%s4 + $0x10] sm:$0xff]
    %v63 = vld [vmem:[%s4 + $0x18] sm:$0xff]
    %v64 = vld [vmem:[%s5] sm:$0xff]
    %v65 = vld [vmem:[%s5 + $0x8] sm:$0xff]
    %v66 = vld [vmem:[%s5 + $0x10] sm:$0xff]
    %v67 = vld [vmem:[%s5 + $0x18] sm:$0xff]
    %vm68 = vcmask 64512
    %v70 = vsel %vm68, %v60, 0
    %v73 = vsel %vm68, %v61, 0
    %v76 = vsel %vm68, %v62, 0
    %v79 = vsel %vm68, %v63, 0
    %81 = vmatprep.subr.mxu0 0.0
    %82 = vmatpush1.msra.mxu0 0.0
    %83 = vmatprep.subr.mxu0 0.0
    %84 = vmatpush1.msra.mxu0 0.0
    %85 = vmatprep.subr.mxu0 0.0
    %86 = vmatpush1.msra.mxu0 0.0
    %87 = vmatprep.subr.mxu0 0.0
    %88 = vmatpush1.msra.mxu0 0.0
    %89 = vmatprep.subr.mxu0 0.0
    %90 = vmatpush1.msra.mxu0 0.0
    %91 = vmatprep.subr.mxu0 0.0
    %92 = vmatpush1.msra.mxu0 0.0
    %93 = vmatprep.subr.mxu0 0.0
    %94 = vmatpush1.msra.mxu0 0.0
    %95 = vmatprep.subr.mxu0 0.0
    %96 = vmatpush1.msra.mxu0 0.0
    %97 = vmatprep.subr.mxu0 0.0
    %98 = vmatpush1.msra.mxu0 0.0
    %99 = vmatprep.subr.mxu0 0.0
    %100 = vmatpush1.msra.mxu0 0.0
    %101 = vmatprep.subr.mxu0 0.0
    %102 = vmatpush1.msra.mxu0 0.0
    %103 = vmatprep.subr.mxu0 0.0
    %104 = vmatpush1.msra.mxu0 0.0
    %105 = vmatprep.subr.mxu0 0.0
    %106 = vmatpush1.msra.mxu0 0.0
    %107 = vmatprep.subr.mxu0 0.0
    %108 = vmatpush1.msra.mxu0 0.0
    %109 = vmatprep.subr.mxu0 0.0
    %110 = vmatpush1.msra.mxu0 0.0
    %111 = vmatprep.subr.mxu0 0.0
    %112 = vmatpush1.msra.mxu0 %v55
    %113 = vmatprep.subr.mxu0 0.0
    %114 = vmatpush2.msra.mxu0 0.0
    %115 = vmatprep.subr.mxu0 0.0
    %116 = vmatpush2.msra.mxu0 0.0
    %117 = vmatprep.subr.mxu0 0.0
    %118 = vmatpush2.msra.mxu0 0.0
    %119 = vmatprep.subr.mxu0 0.0
    %120 = vmatpush2.msra.mxu0 0.0
    %121 = vmatprep.subr.mxu0 0.0
    %122 = vmatpush2.msra.mxu0 0.0
    %123 = vmatprep.subr.mxu0 0.0
    %124 = vmatpush2.msra.mxu0 0.0
    %125 = vmatprep.subr.mxu0 0.0
    %126 = vmatpush2.msra.mxu0 0.0
    %127 = vmatprep.subr.mxu0 0.0
    %128 = vmatpush2.msra.mxu0 0.0
    %129 = vmatprep.subr.mxu0 0.0
    %130 = vmatpush2.msra.mxu0 0.0
    %131 = vmatprep.subr.mxu0 0.0
    %132 = vmatpush2.msra.mxu0 0.0
    %133 = vmatprep.subr.mxu0 0.0
    %134 = vmatpush2.msra.mxu0 0.0
    %135 = vmatprep.subr.mxu0 0.0
    %136 = vmatpush2.msra.mxu0 0.0
    %137 = vmatprep.subr.mxu0 0.0
    %138 = vmatpush2.msra.mxu0 0.0
    %139 = vmatprep.subr.mxu0 0.0
    %140 = vmatpush2.msra.mxu0 0.0
    %141 = vmatprep.subr.mxu0 0.0
    %142 = vmatpush2.msra.mxu0 0.0
    %143 = vmatprep.subr.mxu0 0.0
    %144 = vmatpush2.msra.mxu0 0.0
    %145 = vmatprep.mubr.f32.mxu0 0.0
    %146 = vmatmul.mubr.f32.gmra.mxu0 %v70
    %v147 = vpop.f32.mrf.mxu0
    %v148 = vadd.f32 0.0, %v147
    %v149 = vpop.f32.mrf.mxu0
    %150 = vmatprep.mubr.f32.mxu0 0.0
    %151 = vmatmul.mubr.f32.gmra.mxu0 %v73
    %v152 = vpop.f32.mrf.mxu0
    %v153 = vadd.f32 0.0, %v152
    %v154 = vpop.f32.mrf.mxu0
    %155 = vmatprep.mubr.f32.mxu0 0.0
    %156 = vmatmul.mubr.f32.gmra.mxu0 %v76
    %v157 = vpop.f32.mrf.mxu0
    %v158 = vadd.f32 0.0, %v157
    %v159 = vpop.f32.mrf.mxu0
    %160 = vmatprep.mubr.f32.mxu0 0.0
    %161 = vmatmul.mubr.f32.gmra.mxu0 %v79
    %v162 = vpop.f32.mrf.mxu0
    %v163 = vadd.f32 0.0, %v162
    %v164 = vpop.f32.mrf.mxu0
    %165 = vdwg.mxu0
    %v167 = vsel %vm68, %v56, 0
    %v170 = vsel %vm68, %v57, 0
    %v173 = vsel %vm68, %v58, 0
    %v176 = vsel %vm68, %v59, 0
    %178 = vmatprep.subr.mxu0 0.0
    %179 = vmatpush1.msra.mxu0 0.0
    %180 = vmatprep.subr.mxu0 0.0
    %181 = vmatpush1.msra.mxu0 0.0
    %182 = vmatprep.subr.mxu0 0.0
    %183 = vmatpush1.msra.mxu0 0.0
    %184 = vmatprep.subr.mxu0 0.0
    %185 = vmatpush1.msra.mxu0 0.0
    %186 = vmatprep.subr.mxu0 0.0
    %187 = vmatpush1.msra.mxu0 0.0
    %188 = vmatprep.subr.mxu0 0.0
    %189 = vmatpush1.msra.mxu0 0.0
    %190 = vmatprep.subr.mxu0 0.0
    %191 = vmatpush1.msra.mxu0 0.0
    %192 = vmatprep.subr.mxu0 0.0
    %193 = vmatpush1.msra.mxu0 0.0
    %194 = vmatprep.subr.mxu0 0.0
    %195 = vmatpush1.msra.mxu0 0.0
    %196 = vmatprep.subr.mxu0 0.0
    %197 = vmatpush1.msra.mxu0 0.0
    %198 = vmatprep.subr.mxu0 0.0
    %199 = vmatpush1.msra.mxu0 0.0
    %200 = vmatprep.subr.mxu0 0.0
    %201 = vmatpush1.msra.mxu0 0.0
    %202 = vmatprep.subr.mxu0 0.0
    %203 = vmatpush1.msra.mxu0 0.0
    %204 = vmatprep.subr.mxu0 0.0
    %205 = vmatpush1.msra.mxu0 0.0
    %206 = vmatprep.subr.mxu0 0.0
    %207 = vmatpush1.msra.mxu0 0.0
    %208 = vmatprep.subr.mxu0 0.0
    %209 = vmatpush1.msra.mxu0 %v54
    %210 = vmatprep.subr.mxu0 0.0
    %211 = vmatpush2.msra.mxu0 0.0
    %212 = vmatprep.subr.mxu0 0.0
    %213 = vmatpush2.msra.mxu0 0.0
    %214 = vmatprep.subr.mxu0 0.0
    %215 = vmatpush2.msra.mxu0 0.0
    %216 = vmatprep.subr.mxu0 0.0
    %217 = vmatpush2.msra.mxu0 0.0
    %218 = vmatprep.subr.mxu0 0.0
    %219 = vmatpush2.msra.mxu0 0.0
    %220 = vmatprep.subr.mxu0 0.0
    %221 = vmatpush2.msra.mxu0 0.0
    %222 = vmatprep.subr.mxu0 0.0
    %223 = vmatpush2.msra.mxu0 0.0
    %224 = vmatprep.subr.mxu0 0.0
    %225 = vmatpush2.msra.mxu0 0.0
    %226 = vmatprep.subr.mxu0 0.0
    %227 = vmatpush2.msra.mxu0 0.0
    %228 = vmatprep.subr.mxu0 0.0
    %229 = vmatpush2.msra.mxu0 0.0
    %230 = vmatprep.subr.mxu0 0.0
    %231 = vmatpush2.msra.mxu0 0.0
    %232 = vmatprep.subr.mxu0 0.0
    %233 = vmatpush2.msra.mxu0 0.0
    %234 = vmatprep.subr.mxu0 0.0
    %235 = vmatpush2.msra.mxu0 0.0
    %236 = vmatprep.subr.mxu0 0.0
    %237 = vmatpush2.msra.mxu0 0.0
    %238 = vmatprep.subr.mxu0 0.0
    %239 = vmatpush2.msra.mxu0 0.0
    %240 = vmatprep.subr.mxu0 0.0
    %241 = vmatpush2.msra.mxu0 0.0
    %242 = vmatprep.mubr.f32.mxu0 0.0
    %243 = vmatmul.mubr.f32.gmra.mxu0 %v167
    %v244 = vpop.f32.mrf.mxu0
    %v245 = vadd.f32 %v148, %v244
    %v246 = vpop.f32.mrf.mxu0
    %247 = vmatprep.mubr.f32.mxu0 0.0
    %248 = vmatmul.mubr.f32.gmra.mxu0 %v170
    %v249 = vpop.f32.mrf.mxu0
    %v250 = vadd.f32 %v153, %v249
    %v251 = vpop.f32.mrf.mxu0
    %252 = vmatprep.mubr.f32.mxu0 0.0
    %253 = vmatmul.mubr.f32.gmra.mxu0 %v173
    %v254 = vpop.f32.mrf.mxu0
    %v255 = vadd.f32 %v158, %v254
    %v256 = vpop.f32.mrf.mxu0
    %257 = vmatprep.mubr.f32.mxu0 0.0
    %258 = vmatmul.mubr.f32.gmra.mxu0 %v176
    %v259 = vpop.f32.mrf.mxu0
    %v260 = vadd.f32 %v163, %v259
    %v261 = vpop.f32.mrf.mxu0
    %262 = vdwg.mxu0
    %264 = vset.pattern.permute.xlu0 0
    %265 = vperm.xlu0 %264, %v64
    %v266 = vpop.permute.xlu0 %265
    %269 = vset.pattern.permute.xlu0 0
    %270 = vperm.xlu0 %269, %v65
    %v271 = vpop.permute.xlu0 %270
    %274 = vset.pattern.permute.xlu0 0
    %275 = vperm.xlu0 %274, %v66
    %v276 = vpop.permute.xlu0 %275
    %279 = vset.pattern.permute.xlu0 0
    %280 = vperm.xlu0 %279, %v67
    %v281 = vpop.permute.xlu0 %280
    %v283 = vadd.f32 %v245, %v266
    %v284 = vadd.f32 %v250, %v271
    %v285 = vadd.f32 %v255, %v276
    %v286 = vadd.f32 %v260, %v281
    %v287 = vlaneseq
    %v288 = vshrl.u32 %v287, 7
    %v289 = vadd.s32 %v288, 8
    %v290 = vadd.s32 %v288, 16
    %v291 = vadd.s32 %v288, 24
    %v292 = vmul.u32 %v288, 374761393
    %v293 = vmul.u32 %v289, 374761393
    %v294 = vmul.u32 %v290, 374761393
    %v295 = vmul.u32 %v291, 374761393
    %v296 = vadd.s32 %v53, %v292
    %v297 = vadd.s32 %v53, %v293
    %v298 = vadd.s32 %v53, %v294
    %v299 = vadd.s32 %v53, %v295
    %v300 = vshrl.u32 %v296, 16
    %v301 = vshrl.u32 %v297, 16
    %v302 = vshrl.u32 %v298, 16
    %v303 = vshrl.u32 %v299, 16
    %v304 = vxor.u32 %v296, %v300
    %v305 = vxor.u32 %v297, %v301
    %v306 = vxor.u32 %v298, %v302
    %v307 = vxor.u32 %v299, %v303
    %v308 = vmul.u32 %v304, 2146121005
    %v309 = vmul.u32 %v305, 2146121005
    %v310 = vmul.u32 %v306, 2146121005
    %v311 = vmul.u32 %v307, 2146121005
    %v312 = vshrl.u32 %v308, 15
    %v313 = vshrl.u32 %v309, 15
    %v314 = vshrl.u32 %v310, 15
    %v315 = vshrl.u32 %v311, 15
    %v316 = vxor.u32 %v308, %v312
    %v317 = vxor.u32 %v309, %v313
    %v318 = vxor.u32 %v310, %v314
    %v319 = vxor.u32 %v311, %v315
    %v320 = vmul.u32 %v316, 2221713035
    %v321 = vmul.u32 %v317, 2221713035
    %v322 = vmul.u32 %v318, 2221713035
    %v323 = vmul.u32 %v319, 2221713035
    %v324 = vshrl.u32 %v320, 16
    %v325 = vshrl.u32 %v321, 16
    %v326 = vshrl.u32 %v322, 16
    %v327 = vshrl.u32 %v323, 16
    %v328 = vxor.u32 %v320, %v324
    %v329 = vxor.u32 %v321, %v325
    %v330 = vxor.u32 %v322, %v326
    %v331 = vxor.u32 %v323, %v327
    %v332 = vand.u32 %v328, 2147483647
    %v333 = vand.u32 %v329, 2147483647
    %v334 = vand.u32 %v330, 2147483647
    %v335 = vand.u32 %v331, 2147483647
    %vm336 = vcmp.ge.s32.totalorder %v332, 214748364
    %vm337 = vcmp.ge.s32.totalorder %v333, 214748364
    %vm338 = vcmp.ge.s32.totalorder %v334, 214748364
    %vm339 = vcmp.ge.s32.totalorder %v335, 214748364
    %v340 = vsel %vm336, %v283, 0.0
    %v341 = vsel %vm337, %v284, 0.0
    %v342 = vsel %vm338, %v285, 0.0
    %v343 = vsel %vm339, %v286, 0.0
    %v344 = vmax.f32 %v340, 0.0
    %v345 = vmax.f32 %v341, 0.0
    %v346 = vmax.f32 %v342, 0.0
    %v347 = vmax.f32 %v343, 0.0
    %v348 = vld [vmem:[%s6] sm:$0xff]
    %v349 = vld [vmem:[%s6 + $0x8] sm:$0xff]
    %v350 = vld [vmem:[%s7] sm:$0xff]
    %v351 = vld [vmem:[%s7 + $0x8] sm:$0xff]
    %353 = vset.pattern.permute.xlu0 0
    %354 = vperm.xlu0 %353, %v350
    %v355 = vpop.permute.xlu0 %354
    %358 = vset.pattern.permute.xlu0 0
    %359 = vperm.xlu0 %358, %v351
    %v360 = vpop.permute.xlu0 %359
    %vm362 = vcmask 261120
    %v364 = vsel %vm362, %v348, 0
    %v367 = vsel %vm362, %v349, 0
    %369 = vmatprep.subr.mxu0 0.0
    %370 = vmatpush1.msra.mxu0 0.0
    %371 = vmatprep.subr.mxu0 0.0
    %372 = vmatpush1.msra.mxu0 0.0
    %373 = vmatprep.subr.mxu0 0.0
    %374 = vmatpush1.msra.mxu0 0.0
    %375 = vmatprep.subr.mxu0 0.0
    %376 = vmatpush1.msra.mxu0 0.0
    %377 = vmatprep.subr.mxu0 0.0
    %378 = vmatpush1.msra.mxu0 0.0
    %379 = vmatprep.subr.mxu0 0.0
    %380 = vmatpush1.msra.mxu0 0.0
    %381 = vmatprep.subr.mxu0 0.0
    %382 = vmatpush1.msra.mxu0 0.0
    %383 = vmatprep.subr.mxu0 0.0
    %384 = vmatpush1.msra.mxu0 0.0
    %385 = vmatprep.subr.mxu0 0.0
    %386 = vmatpush1.msra.mxu0 0.0
    %387 = vmatprep.subr.mxu0 0.0
    %388 = vmatpush1.msra.mxu0 0.0
    %389 = vmatprep.subr.mxu0 0.0
    %390 = vmatpush1.msra.mxu0 0.0
    %391 = vmatprep.subr.mxu0 0.0
    %392 = vmatpush1.msra.mxu0 0.0
    %393 = vmatprep.subr.mxu0 0.0
    %394 = vmatpush1.msra.mxu0 %v347
    %395 = vmatprep.subr.mxu0 0.0
    %396 = vmatpush1.msra.mxu0 %v346
    %397 = vmatprep.subr.mxu0 0.0
    %398 = vmatpush1.msra.mxu0 %v345
    %399 = vmatprep.subr.mxu0 0.0
    %400 = vmatpush1.msra.mxu0 %v344
    %401 = vmatprep.subr.mxu0 0.0
    %402 = vmatpush2.msra.mxu0 0.0
    %403 = vmatprep.subr.mxu0 0.0
    %404 = vmatpush2.msra.mxu0 0.0
    %405 = vmatprep.subr.mxu0 0.0
    %406 = vmatpush2.msra.mxu0 0.0
    %407 = vmatprep.subr.mxu0 0.0
    %408 = vmatpush2.msra.mxu0 0.0
    %409 = vmatprep.subr.mxu0 0.0
    %410 = vmatpush2.msra.mxu0 0.0
    %411 = vmatprep.subr.mxu0 0.0
    %412 = vmatpush2.msra.mxu0 0.0
    %413 = vmatprep.subr.mxu0 0.0
    %414 = vmatpush2.msra.mxu0 0.0
    %415 = vmatprep.subr.mxu0 0.0
    %416 = vmatpush2.msra.mxu0 0.0
    %417 = vmatprep.subr.mxu0 0.0
    %418 = vmatpush2.msra.mxu0 0.0
    %419 = vmatprep.subr.mxu0 0.0
    %420 = vmatpush2.msra.mxu0 0.0
    %421 = vmatprep.subr.mxu0 0.0
    %422 = vmatpush2.msra.mxu0 0.0
    %423 = vmatprep.subr.mxu0 0.0
    %424 = vmatpush2.msra.mxu0 0.0
    %425 = vmatprep.subr.mxu0 0.0
    %426 = vmatpush2.msra.mxu0 0.0
    %427 = vmatprep.subr.mxu0 0.0
    %428 = vmatpush2.msra.mxu0 0.0
    %429 = vmatprep.subr.mxu0 0.0
    %430 = vmatpush2.msra.mxu0 0.0
    %431 = vmatprep.subr.mxu0 0.0
    %432 = vmatpush2.msra.mxu0 0.0
    %433 = vmatprep.mubr.f32.mxu0 0.0
    %434 = vmatmul.mubr.f32.gmra.mxu0 %v364
    %v435 = vpop.f32.mrf.mxu0
    %v436 = vadd.f32 %v355, %v435
    %v437 = vpop.f32.mrf.mxu0
    %438 = vmatprep.mubr.f32.mxu0 0.0
    %439 = vmatmul.mubr.f32.gmra.mxu0 %v367
    %v440 = vpop.f32.mrf.mxu0
    %v441 = vadd.f32 %v360, %v440
    %v442 = vpop.f32.mrf.mxu0
    %443 = vdwg.mxu0
    %v444 = vadd.s32 %v53, 1663821211
    %v445 = vadd.s32 %v444, %v292
    %v446 = vadd.s32 %v444, %v293
    %v447 = vshrl.u32 %v445, 16
    %v448 = vshrl.u32 %v446, 16
    %v449 = vxor.u32 %v445, %v447
    %v450 = vxor.u32 %v446, %v448
    %v451 = vmul.u32 %v449, 2146121005
    %v452 = vmul.u32 %v450, 2146121005
    %v453 = vshrl.u32 %v451, 15
    %v454 = vshrl.u32 %v452, 15
    %v455 = vxor.u32 %v451, %v453
    %v456 = vxor.u32 %v452, %v454
    %v457 = vmul.u32 %v455, 2221713035
    %v458 = vmul.u32 %v456, 2221713035
    %v459 = vshrl.u32 %v457, 16
    %v460 = vshrl.u32 %v458, 16
    %v461 = vxor.u32 %v457, %v459
    %v462 = vxor.u32 %v458, %v460
    %v463 = vand.u32 %v461, 2147483647
    %v464 = vand.u32 %v462, 2147483647
    %vm465 = vcmp.ge.s32.totalorder %v463, 214748364
    %vm466 = vcmp.ge.s32.totalorder %v464, 214748364
    %v467 = vsel %vm465, %v436, 0.0
    %v468 = vsel %vm466, %v441, 0.0
    %v469 = vmax.f32 %v467, 0.0
    %v470 = vmax.f32 %v468, 0.0
    %v471 = vld [vmem:[%s8] sm:$0xff]
    %v472 = vld [vmem:[%s9] sm:$0xff]
    %474 = vset.pattern.permute.xlu0 0
    %475 = vperm.xlu0 %474, %v472
    %v476 = vpop.permute.xlu0 %475
    %vm478 = vcmask 130048
    %v480 = vsel %vm478, %v471, 0
    %482 = vmatprep.subr.mxu0 0.0
    %483 = vmatpush1.msra.mxu0 0.0
    %484 = vmatprep.subr.mxu0 0.0
    %485 = vmatpush1.msra.mxu0 0.0
    %486 = vmatprep.subr.mxu0 0.0
    %487 = vmatpush1.msra.mxu0 0.0
    %488 = vmatprep.subr.mxu0 0.0
    %489 = vmatpush1.msra.mxu0 0.0
    %490 = vmatprep.subr.mxu0 0.0
    %491 = vmatpush1.msra.mxu0 0.0
    %492 = vmatprep.subr.mxu0 0.0
    %493 = vmatpush1.msra.mxu0 0.0
    %494 = vmatprep.subr.mxu0 0.0
    %495 = vmatpush1.msra.mxu0 0.0
    %496 = vmatprep.subr.mxu0 0.0
    %497 = vmatpush1.msra.mxu0 0.0
    %498 = vmatprep.subr.mxu0 0.0
    %499 = vmatpush1.msra.mxu0 0.0
    %500 = vmatprep.subr.mxu0 0.0
    %501 = vmatpush1.msra.mxu0 0.0
    %502 = vmatprep.subr.mxu0 0.0
    %503 = vmatpush1.msra.mxu0 0.0
    %504 = vmatprep.subr.mxu0 0.0
    %505 = vmatpush1.msra.mxu0 0.0
    %506 = vmatprep.subr.mxu0 0.0
    %507 = vmatpush1.msra.mxu0 0.0
    %508 = vmatprep.subr.mxu0 0.0
    %509 = vmatpush1.msra.mxu0 0.0
    %510 = vmatprep.subr.mxu0 0.0
    %511 = vmatpush1.msra.mxu0 %v470
    %512 = vmatprep.subr.mxu0 0.0
    %513 = vmatpush1.msra.mxu0 %v469
    %514 = vmatprep.subr.mxu0 0.0
    %515 = vmatpush2.msra.mxu0 0.0
    %516 = vmatprep.subr.mxu0 0.0
    %517 = vmatpush2.msra.mxu0 0.0
    %518 = vmatprep.subr.mxu0 0.0
    %519 = vmatpush2.msra.mxu0 0.0
    %520 = vmatprep.subr.mxu0 0.0
    %521 = vmatpush2.msra.mxu0 0.0
    %522 = vmatprep.subr.mxu0 0.0
    %523 = vmatpush2.msra.mxu0 0.0
    %524 = vmatprep.subr.mxu0 0.0
    %525 = vmatpush2.msra.mxu0 0.0
    %526 = vmatprep.subr.mxu0 0.0
    %527 = vmatpush2.msra.mxu0 0.0
    %528 = vmatprep.subr.mxu0 0.0
    %529 = vmatpush2.msra.mxu0 0.0
    %530 = vmatprep.subr.mxu0 0.0
    %531 = vmatpush2.msra.mxu0 0.0
    %532 = vmatprep.subr.mxu0 0.0
    %533 = vmatpush2.msra.mxu0 0.0
    %534 = vmatprep.subr.mxu0 0.0
    %535 = vmatpush2.msra.mxu0 0.0
    %536 = vmatprep.subr.mxu0 0.0
    %537 = vmatpush2.msra.mxu0 0.0
    %538 = vmatprep.subr.mxu0 0.0
    %539 = vmatpush2.msra.mxu0 0.0
    %540 = vmatprep.subr.mxu0 0.0
    %541 = vmatpush2.msra.mxu0 0.0
    %542 = vmatprep.subr.mxu0 0.0
    %543 = vmatpush2.msra.mxu0 0.0
    %544 = vmatprep.subr.mxu0 0.0
    %545 = vmatpush2.msra.mxu0 0.0
    %546 = vmatprep.mubr.f32.mxu0 0.0
    %547 = vmatmul.mubr.f32.gmra.mxu0 %v480
    %v548 = vpop.f32.mrf.mxu0
    %v549 = vadd.f32 %v476, %v548
    %v550 = vpop.f32.mrf.mxu0
    %551 = vdwg.mxu0
    %v552 = vadd.s32 %v53, 3327642422
    %v553 = vadd.s32 %v552, %v292
    %v554 = vshrl.u32 %v553, 16
    %v555 = vxor.u32 %v553, %v554
    %v556 = vmul.u32 %v555, 2146121005
    %v557 = vshrl.u32 %v556, 15
    %v558 = vxor.u32 %v556, %v557
    %v559 = vmul.u32 %v558, 2221713035
    %v560 = vshrl.u32 %v559, 16
    %v561 = vxor.u32 %v559, %v560
    %v562 = vand.u32 %v561, 2147483647
    %vm563 = vcmp.ge.s32.totalorder %v562, 214748364
    %v564 = vsel %vm563, %v549, 0.0
    %v565 = vmax.f32 %v564, 0.0
    %v566 = vld [vmem:[%s10] sm:$0x1]
    %v567 = vld [vmem:[#allocation3] sm:$0x1]
    %569 = vset.pattern.permute.xlu0 0
    %570 = vperm.xlu0 %569, %v567
    %v571 = vpop.permute.xlu0 %570
    %v573 = vlaneseq
    %v574 = vshrl.u32 %v573, 7
    %v575 = vsub.s32 0, %v574
    %v576 = vrot.slane %v571, %v575
    %v578 = vsel %vm68, %v566, 0
    %580 = vmatprep.subr.mxu0 0.0
    %581 = vmatpush1.msra.mxu0 0.0
    %582 = vmatprep.subr.mxu0 0.0
    %583 = vmatpush1.msra.mxu0 0.0
    %584 = vmatprep.subr.mxu0 0.0
    %585 = vmatpush1.msra.mxu0 0.0
    %586 = vmatprep.subr.mxu0 0.0
    %587 = vmatpush1.msra.mxu0 0.0
    %588 = vmatprep.subr.mxu0 0.0
    %589 = vmatpush1.msra.mxu0 0.0
    %590 = vmatprep.subr.mxu0 0.0
    %591 = vmatpush1.msra.mxu0 0.0
    %592 = vmatprep.subr.mxu0 0.0
    %593 = vmatpush1.msra.mxu0 0.0
    %594 = vmatprep.subr.mxu0 0.0
    %595 = vmatpush1.msra.mxu0 0.0
    %596 = vmatprep.subr.mxu0 0.0
    %597 = vmatpush1.msra.mxu0 0.0
    %598 = vmatprep.subr.mxu0 0.0
    %599 = vmatpush1.msra.mxu0 0.0
    %600 = vmatprep.subr.mxu0 0.0
    %601 = vmatpush1.msra.mxu0 0.0
    %602 = vmatprep.subr.mxu0 0.0
    %603 = vmatpush1.msra.mxu0 0.0
    %604 = vmatprep.subr.mxu0 0.0
    %605 = vmatpush1.msra.mxu0 0.0
    %606 = vmatprep.subr.mxu0 0.0
    %607 = vmatpush1.msra.mxu0 0.0
    %608 = vmatprep.subr.mxu0 0.0
    %609 = vmatpush1.msra.mxu0 0.0
    %610 = vmatprep.subr.mxu0 0.0
    %611 = vmatpush1.msra.mxu0 %v565
    %612 = vmatprep.subr.mxu0 0.0
    %613 = vmatpush2.msra.mxu0 0.0
    %614 = vmatprep.subr.mxu0 0.0
    %615 = vmatpush2.msra.mxu0 0.0
    %616 = vmatprep.subr.mxu0 0.0
    %617 = vmatpush2.msra.mxu0 0.0
    %618 = vmatprep.subr.mxu0 0.0
    %619 = vmatpush2.msra.mxu0 0.0
    %620 = vmatprep.subr.mxu0 0.0
    %621 = vmatpush2.msra.mxu0 0.0
    %622 = vmatprep.subr.mxu0 0.0
    %623 = vmatpush2.msra.mxu0 0.0
    %624 = vmatprep.subr.mxu0 0.0
    %625 = vmatpush2.msra.mxu0 0.0
    %626 = vmatprep.subr.mxu0 0.0
    %627 = vmatpush2.msra.mxu0 0.0
    %628 = vmatprep.subr.mxu0 0.0
    %629 = vmatpush2.msra.mxu0 0.0
    %630 = vmatprep.subr.mxu0 0.0
    %631 = vmatpush2.msra.mxu0 0.0
    %632 = vmatprep.subr.mxu0 0.0
    %633 = vmatpush2.msra.mxu0 0.0
    %634 = vmatprep.subr.mxu0 0.0
    %635 = vmatpush2.msra.mxu0 0.0
    %636 = vmatprep.subr.mxu0 0.0
    %637 = vmatpush2.msra.mxu0 0.0
    %638 = vmatprep.subr.mxu0 0.0
    %639 = vmatpush2.msra.mxu0 0.0
    %640 = vmatprep.subr.mxu0 0.0
    %641 = vmatpush2.msra.mxu0 0.0
    %642 = vmatprep.subr.mxu0 0.0
    %643 = vmatpush2.msra.mxu0 0.0
    %644 = vmatprep.mubr.f32.mxu0 0.0
    %645 = vmatmul.mubr.f32.gmra.mxu0 %v578
    %v646 = vpop.f32.mrf.mxu0
    %v647 = vadd.f32 %v576, %v646
    %v648 = vpop.f32.mrf.mxu0
    %649 = vdwg.mxu0
    %650 = vst [vmem:[#allocation4] sm:$0x1] %v647
    // Predicated region
    $region50: #{tpu_custom_call.1} parent=1 // pred_check
      _
    $region51: #{tpu_custom_call.1} parent=1 // pred_check_branch
      %652 = sbr.rel (0) target = $region53
    $region52: #{tpu_custom_call.1} parent=1 // pred_region
      %s654 = ssub.s32 16, 16
      %655 = vsyncadd [#allocation5], %s654
      %s657 = sshll.u32 [#allocation4], 4
      %s658 = int_to_ptr.vmem [resolvable:$true] %s657
      %660 = dma.vmem_to_hbm [thread:$0]  %s658, 16, %s12, [#allocation5]
    $region53: #{tpu_custom_call.1} parent=1 // pred_fallthru
      _
    // Predicated region
    $region54: #{tpu_custom_call.1} parent=1 // pred_check
      _
    $region55: #{tpu_custom_call.1} parent=1 // pred_check_branch
      %662 = sbr.rel (0) target = $region57
    $region56: #{tpu_custom_call.1} parent=1 // pred_region
      %663 = dma.done [#allocation5], 16
    $region57: #{tpu_custom_call.1} parent=1 // pred_fallthru
      _
    %664 = vsyncpa [#allocation5], 1

</llo_original>
